<compile_context>
chip_gen: v7x
topology: tpu7x:2x2x1
jax: 0.10.0
libtpu: 0.0.40
codegen_flags: <defaults>
</compile_context>

<pallas_src>
import math

import jax
import jax.numpy as jnp
from jax import lax
from jax.experimental import pallas as pl
from jax.experimental.pallas import tpu as pltpu


def _round_up(x, m):
    return ((x + m - 1) // m) * m


def _cdiv(a, b):
    return -(-a // b)


def _vmem_capacity_bytes():
    """Physical VMEM per TensorCore; conservative (v7x-sized) fallback."""
    try:
        return int(pltpu.get_tpu_info().vmem_capacity_bytes)
    except Exception:
        return 64 * 1024 * 1024


def _fused_vmem_estimate(tile_i, tile_j, lb, n_lg, H_p, D_p, isz):
    """Rough per-step resident-set estimate (bytes) for the tiled kernel."""
    u_bufs = 1 if n_lg == 1 else 2         # resident U block is single-buffered
    return (u_bufs * H_p * lb * D_p * isz          # fused U block
            + 2 * tile_i * H_p * isz               # Hh block (double-buffered)
            + 2 * tile_j * D_p * isz               # Hd block (double-buffered)
            + 2 * lb * tile_i * tile_j * 4         # f32 output block (dbl-buf)
            + tile_i * lb * D_p * isz              # T scratch (compute dtype)
            + tile_i * lb * D_p * 4                # f32 first-matmul result
            + tile_i * tile_j * 4)                 # f32 second-matmul result


def _choose_tiling(n, H_p, D_p, L, isz, budget, sub, big_tiles,
                   max_label_block=None):
    """Pick (tile_i, tile_j, label_block, num_label_groups, vmem_estimate)."""
    ti_target, tj_target = (512, 1024) if big_tiles else (256, 512)

    if n <= ti_target:
        ti_opts = [n] + [t for t in (256, 128, 64, 32, 16, 8)
                         if t < n and t % sub == 0]
    else:
        ti_opts = [t for t in (512, 256, 128, 64, 32, 16, 8)
                   if t <= ti_target and t % sub == 0] or [sub]

    if n < 128:
        tj_opts = [n]
    else:
        max_tj = min(tj_target, (n // 128) * 128)
        tj_opts = [t for t in (1024, 512, 256, 128) if t <= max_tj] or [128]

    combos = sorted(((ti, tj) for ti in ti_opts for tj in tj_opts),
                    key=lambda p: (p[0] * p[1], p[1]), reverse=True)

    lb = L if max_label_block is None else max(1, min(L, int(max_label_block)))
    best = None
    while True:
        n_lg = _cdiv(L, lb)
        for ti, tj in combos:
            est = _fused_vmem_estimate(ti, tj, lb, n_lg, H_p, D_p, isz)
            if est <= budget:
                return ti, tj, lb, n_lg, est
            if best is None or est < best[4]:
                best = (ti, tj, lb, n_lg, est)
        if lb == 1:
            return best          # nothing fits the budget; take the smallest
        lb = _cdiv(lb, 2)        # halve the label group and retry


def _biaffine_tiled_kernel(hh_ref, uf_ref, hd_ref, s_ref, t_ref):
    """One (label-group, batch, i-tile, j-tile) grid step.

    hh_ref: (1, tile_i, H_p)          compute dtype
    uf_ref: (H_p, lb * D_p)           compute dtype (resident when n_lg == 1)
    hd_ref: (1, tile_j, D_p)          compute dtype
    s_ref : (1, lb, tile_i, tile_j)   f32 output tile
    t_ref : (tile_i, lb * D_p)        VMEM scratch, persists across j tiles
    """
    lb = s_ref.shape[1]
    d_p = hd_ref.shape[2]

    # First matmul only when entering a new (lg, b, i) unit (j == 0).  One wide
    # (tile_i, H_p) @ (H_p, lb*D_p) keeps the MXU at full width; the live f32
    # intermediate is bounded by the label-group / tile_i choice, and the cast
    # result is parked in VMEM scratch rather than held live in vregs.
    @pl.when(pl.program_id(3) == 0)
    def _():
        t = jnp.dot(hh_ref[0], uf_ref[...],
                    preferred_element_type=jnp.float32)
        t_ref[...] = t.astype(t_ref.dtype)

    hd = hd_ref[0]                                   # (tile_j, D_p)

    def per_label(l, carry):
        off = pl.multiple_of(l * d_p, 128)           # lane-aligned slice start
        t_l = t_ref[:, pl.ds(off, d_p)]              # (tile_i, D_p)
        # Contract the minor dim of BOTH operands (A @ B^T form) -> MXU,
        # no transpose / relayout of hd.
        s = lax.dot_general(
            t_l, hd,
            dimension_numbers=(((1,), (1,)), ((), ())),
            preferred_element_type=jnp.float32)
        s_ref[0, l] = s.astype(s_ref.dtype)
        return carry

    lax.fori_loop(0, lb, per_label, 0,
                  unroll=(lb if lb <= 8 else 8))


def biaffine_pallas(Hh, Hd, U, use_bias=False, *,
                    compute_dtype=jnp.bfloat16,
                    max_label_block=None,
                    single_buffer_u=True,
                    vmem_limit_bytes=None):
    """Pallas implementation of BiAffine.forward.

    Hh: [B, n, head_size], Hd: [B, n, dep_size],
    U:  [L, head_size(+1), dep_size(+1)] (already sized for use_bias).
    Returns float32 scores: [B, L, n, n] if L > 1 else [B, n, n].
    """
    B, n, H = Hh.shape
    D = Hd.shape[2]
    L, H_eff, D_eff = U.shape
    assert H_eff == H + (1 if use_bias else 0), "U head dim mismatch"
    assert D_eff == D + (1 if use_bias else 0), "U dep dim mismatch"

    cdt = jnp.dtype(compute_dtype)
    isz = cdt.itemsize
    sub = {1: 32, 2: 16}.get(isz, 8)          # sublane packing of compute dtype

    # Contraction dims padded to x128 (bias column lives inside the padding).
    H_p = _round_up(H_eff, 128)
    D_p = _round_up(D_eff, 128)

    # Generation-keyed VMEM budget + tiling.
    cap = _vmem_capacity_bytes()
    budget = int(0.6 * cap)
    big_tiles = cap >= 96 * 1024 * 1024        # 128 MiB parts (v5e/v6e)
    tile_i, tile_j, lb, n_lg, est = _choose_tiling(
        n, H_p, D_p, L, isz, budget, sub, big_tiles, max_label_block)
    L_pad = lb * n_lg
    n_i = _cdiv(n, tile_i)
    n_j = _cdiv(n, tile_j)

    # --- inputs: cast, pad contraction dims only when actually required ------
    if use_bias or H_p != H:
        Hh_c = jnp.zeros((B, n, H_p), cdt).at[:, :, :H].set(Hh.astype(cdt))
        if use_bias:
            Hh_c = Hh_c.at[:, :, H].set(1.0)
    else:
        Hh_c = Hh.astype(cdt)
    if use_bias or D_p != D:
        Hd_c = jnp.zeros((B, n, D_p), cdt).at[:, :, :D].set(Hd.astype(cdt))
        if use_bias:
            Hd_c = Hd_c.at[:, :, D].set(1.0)
    else:
        Hd_c = Hd.astype(cdt)

    # Fused U: (L, H_eff, D_eff) -> (H_p, L_pad * D_p); label-group lg owns the
    # lane block [lg*lb*D_p, (lg+1)*lb*D_p).  (Weight prep; hoist to init in a
    # real model.)
    if L_pad == L and H_p == H_eff and D_p == D_eff:
        U_pad = U.astype(cdt)
    else:
        U_pad = jnp.zeros((L_pad, H_p, D_p), cdt).at[
            :L, :H_eff, :D_eff].set(U.astype(cdt))
    U_f = jnp.transpose(U_pad, (1, 0, 2)).reshape(H_p, L_pad * D_p)

    # --- compiler params / cost estimate -------------------------------------
    if vmem_limit_bytes is None:
        vmem_limit_bytes = int(min(0.85 * cap,
                                   max(1.4 * est, 32 * 1024 * 1024)))
    cparams = pltpu.CompilerParams(
        dimension_semantics=("parallel", "parallel", "parallel", "arbitrary"),
        vmem_limit_bytes=int(vmem_limit_bytes))

    flops = int(2 * B * L_pad * n * D_p * (H_p + n))
    bytes_accessed = int(n_lg * B * n * (H_p + D_p) * isz
                         + L_pad * H_p * D_p * isz
                         + B * L_pad * n * n * 4)
    cost = pl.CostEstimate(flops=flops, transcendentals=0,
                           bytes_accessed=bytes_accessed)

    # --- pallas_call ----------------------------------------------------------
    def _call(u_pipeline_mode):
        uf_kwargs = ({"pipeline_mode": u_pipeline_mode}
                     if u_pipeline_mode is not None else {})
        in_specs = [
            pl.BlockSpec((1, tile_i, H_p), lambda lg, b, i, j: (b, i, 0)),
            pl.BlockSpec((H_p, lb * D_p), lambda lg, b, i, j: (0, lg),
                         **uf_kwargs),
            pl.BlockSpec((1, tile_j, D_p), lambda lg, b, i, j: (b, j, 0)),
        ]
        out_spec = pl.BlockSpec((1, lb, tile_i, tile_j),
                                lambda lg, b, i, j: (b, lg, i, j))
        return pl.pallas_call(
            _biaffine_tiled_kernel,
            out_shape=jax.ShapeDtypeStruct((B, L_pad, n, n), jnp.float32),
            grid=(n_lg, B, n_i, n_j),
            in_specs=in_specs,
            out_specs=out_spec,
            scratch_shapes=[pltpu.VMEM((tile_i, lb * D_p), cdt)],
            compiler_params=cparams,
            cost_estimate=cost,
        )(Hh_c, U_f, Hd_c)

    if single_buffer_u and n_lg == 1:
        # U block index is constant across the grid: single-buffer it to
        # reclaim its double-buffer VMEM.  Fall back gracefully if this JAX
        # build rejects pipeline_mode / Buffered(1).
        try:
            out = jax.block_until_ready(_call(pl.Buffered(1)))
        except Exception:
            out = _call(None)
    else:
        out = _call(None)

    if L_pad != L:                 # only when label grouping didn't divide L
        out = out[:, :L]
    if L == 1:
        out = out[:, 0]            # squeeze(1), as in the PyTorch module
    return out


def xavier_uniform(key, shape, dtype=jnp.float32):
    # PyTorch xavier_uniform_ on a 3-D tensor (L, H, D):
    # fan_in = H * D, fan_out = L * D.
    L, H, D = shape
    fan_in, fan_out = H * D, L * D
    bound = math.sqrt(6.0 / (fan_in + fan_out))
    return jax.random.uniform(key, shape, dtype, minval=-bound, maxval=bound)


def biaffine_reference(Hh, Hd, U, use_bias=False):
    if use_bias:
        B, n = Hh.shape[0], Hh.shape[1]
        ones = jnp.ones((B, n, 1), dtype=Hh.dtype)
        Hh = jnp.concatenate([Hh, ones], axis=2)
        Hd = jnp.concatenate([Hd, ones], axis=2)
    S = jnp.einsum("bih,lhd,bjd->blij", Hh, U, Hd,
                   precision=lax.Precision.HIGHEST)
    if U.shape[0] == 1:
        S = S[:, 0]
    return S


if __name__ == "__main__":
    key = jax.random.PRNGKey(0)
    k1, k2, k3, k4, k5, k6 = jax.random.split(key, 6)

    def rel_err(a, b):
        a = a.astype(jnp.float32)
        b = b.astype(jnp.float32)
        return float(jnp.linalg.norm(a - b) / (jnp.linalg.norm(b) + 1e-12))

    B, n, head_size, dep_size = 2, 8, 32, 32
    Hh = jax.random.normal(k1, (B, n, head_size), dtype=jnp.float32)
    Hd = jax.random.normal(k2, (B, n, dep_size), dtype=jnp.float32)

    # Arc scoring: num_scores_per_arc = 1 -> [B, n, n]
    U_arc = xavier_uniform(k3, (1, head_size, dep_size))
    S_arc = jax.block_until_ready(biaffine_pallas(Hh, Hd, U_arc))
    assert S_arc.shape == (B, n, n)
    ref_arc = biaffine_reference(Hh, Hd, U_arc)
    assert rel_err(S_arc, ref_arc) < 2e-2          # bf16 MXU, f32 accumulation

    # Label scoring: num_scores_per_arc = 3 -> [B, 3, n, n]
    num_labels = 3
    U_lab = xavier_uniform(k4, (num_labels, head_size, dep_size))
    S_lab = jax.block_until_ready(biaffine_pallas(Hh, Hd, U_lab))
    assert S_lab.shape == (B, num_labels, n, n)
    ref_lab = biaffine_reference(Hh, Hd, U_lab)
    assert rel_err(S_lab, ref_lab) < 2e-2

    # Label-group grid path (used when U is too large to keep fully resident);
    # forced here for coverage, including a non-dividing group size.
    S_g1 = jax.block_until_ready(
        biaffine_pallas(Hh, Hd, U_lab, max_label_block=1))
    assert rel_err(S_g1, ref_lab) < 2e-2
    S_g2 = jax.block_until_ready(
        biaffine_pallas(Hh, Hd, U_lab, max_label_block=2))
    assert rel_err(S_g2, ref_lab) < 2e-2

    # Bias path.
    U_bias = xavier_uniform(k5, (num_labels, head_size + 1, dep_size + 1))
    S_bias = jax.block_until_ready(
        biaffine_pallas(Hh, Hd, U_bias, use_bias=True))
    assert S_bias.shape == (B, num_labels, n, n)
    assert rel_err(S_bias, biaffine_reference(Hh, Hd, U_bias,
                                              use_bias=True)) < 2e-2

    # Medium sequence: exercises the (i, j) tiling with a partial edge j-tile
    # and contraction-dim padding, while writing the exact-n output directly.
    Bm, nm, Hm, Dm, Lm = 2, 160, 40, 24, 2
    Hh_m = jax.random.normal(k6, (Bm, nm, Hm), dtype=jnp.float32)
    Hd_m = jax.random.normal(k1, (Bm, nm, Dm), dtype=jnp.float32)
    U_m = xavier_uniform(k2, (Lm, Hm, Dm))
    S_m = jax.block_until_ready(biaffine_pallas(Hh_m, Hd_m, U_m))
    assert S_m.shape == (Bm, Lm, nm, nm)
    assert rel_err(S_m, biaffine_reference(Hh_m, Hd_m, U_m)) < 2e-2

    # Full-f32 compute path should agree much more tightly.
    S_arc_f32 = jax.block_until_ready(
        biaffine_pallas(Hh, Hd, U_arc, compute_dtype=jnp.float32))
    assert rel_err(S_arc_f32, ref_arc) < 5e-3

    print("KERNEL_OK")
</pallas_src>

<mosaic_0001>
module attributes {stable_mosaic.version = 11 : i64} {
  func.func @_biaffine_tiled_kernel(%arg0: i32, %arg1: i32, %arg2: i32, %arg3: i32, %arg4: memref<1x8x128xbf16, #tpu.memory_space<vmem>>, %arg5: memref<128x128xbf16, #tpu.memory_space<vmem>>, %arg6: memref<1x8x128xbf16, #tpu.memory_space<vmem>>, %arg7: memref<1x1x8x8xf32, #tpu.memory_space<vmem>>, %arg8: memref<8x128xbf16, #tpu.memory_space<vmem>>) attributes {dimension_semantics = [#tpu.dimension_semantics<parallel>, #tpu.dimension_semantics<parallel>, #tpu.dimension_semantics<parallel>, #tpu.dimension_semantics<arbitrary>], iteration_bounds = array<i64: 1, 2, 1, 1>, scalar_prefetch = 0 : i64, scratch_operands = 1 : i64, tpu.core_type = #tpu.core_type<tc>, window_params = [{transform_indices = @transform_0, window_bounds = array<i64: 1, 8, 128>}, {pipeline_mode = #tpu.pipeline_mode<synchronous>, transform_indices = @transform_1, window_bounds = array<i64: 128, 128>}, {transform_indices = @transform_2, window_bounds = array<i64: 1, 8, 128>}, {transform_indices = @transform_3, window_bounds = array<i64: 1, 1, 8, 8>}]} {
    %c0_i32 = arith.constant 0 : i32
    %0 = arith.cmpi eq, %arg3, %c0_i32 : i32
    %1 = arith.extui %0 : i1 to i32
    %c0_i32_0 = arith.constant 0 : i32
    %2 = arith.cmpi ne, %1, %c0_i32_0 : i32
    scf.if %2 {
      %c0_8 = arith.constant 0 : index
      %c0_9 = arith.constant 0 : index
      %c0_10 = arith.constant 0 : index
      %14 = vector.load %arg4[%c0_8, %c0_9, %c0_10] : memref<1x8x128xbf16, #tpu.memory_space<vmem>>, vector<1x8x128xbf16>
      %15 = vector.shape_cast %14 : vector<1x8x128xbf16> to vector<8x128xbf16>
      %c0_11 = arith.constant 0 : index
      %c0_12 = arith.constant 0 : index
      %16 = vector.load %arg5[%c0_11, %c0_12] : memref<128x128xbf16, #tpu.memory_space<vmem>>, vector<128x128xbf16>
      %cst_13 = arith.constant dense<0.000000e+00> : vector<8x128xf32>
      %17 = tpu.matmul %15, %16, %cst_13 {dimension_numbers = #tpu.dot_dimension_numbers<[1], [0], [0], [1], [0, 0, 1, 1], [], []>} : vector<8x128xbf16>, vector<128x128xbf16>, vector<8x128xf32> -> vector<8x128xf32>
      %18 = arith.truncf %17 : vector<8x128xf32> to vector<8x128xbf16>
      %c0_14 = arith.constant 0 : index
      %c0_15 = arith.constant 0 : index
      %19 = vector.load %arg8[%c0_14, %c0_15] : memref<8x128xbf16, #tpu.memory_space<vmem>>, vector<8x128xbf16>
      tpu.vector_store %arg8[%c0_14, %c0_15], %18 {strides = array<i32>} : memref<8x128xbf16, #tpu.memory_space<vmem>>, vector<8x128xbf16>,
    } else {
    }
    %c0 = arith.constant 0 : index
    %c0_1 = arith.constant 0 : index
    %c0_2 = arith.constant 0 : index
    %3 = vector.load %arg6[%c0, %c0_1, %c0_2] : memref<1x8x128xbf16, #tpu.memory_space<vmem>>, vector<1x8x128xbf16>
    %4 = vector.shape_cast %3 : vector<1x8x128xbf16> to vector<8x128xbf16>
    %c0_i32_3 = arith.constant 0 : i32
    %c128_i32 = arith.constant 128 : i32
    %5 = arith.muli %c0_i32_3, %c128_i32 : i32
    %6 = tpu.assume_multiple %5, 128 : i32
    %c0_4 = arith.constant 0 : index
    %7 = arith.index_cast %6 : i32 to index
    %8 = vector.load %arg8[%c0_4, %7] : memref<8x128xbf16, #tpu.memory_space<vmem>>, vector<8x128xbf16>
    %cst = arith.constant dense<0.000000e+00> : vector<8x8xf32>
    %9 = tpu.matmul %8, %4, %cst {dimension_numbers = #tpu.dot_dimension_numbers<[1], [1], [0], [0], [0, 0, 1, 0], [], []>} : vector<8x128xbf16>, vector<8x128xbf16>, vector<8x8xf32> -> vector<8x8xf32>
    %c0_5 = arith.constant 0 : index
    %10 = arith.index_cast %c0_i32_3 : i32 to index
    %c0_6 = arith.constant 0 : index
    %c0_7 = arith.constant 0 : index
    %11 = vector.load %arg7[%c0_5, %10, %c0_6, %c0_7] : memref<1x1x8x8xf32, #tpu.memory_space<vmem>>, vector<1x1x8x8xf32>
    %12 = vector.shape_cast %11 : vector<1x1x8x8xf32> to vector<8x8xf32>
    %13 = vector.shape_cast %9 : vector<8x8xf32> to vector<1x1x8x8xf32>
    tpu.vector_store %arg7[%c0_5, %10, %c0_6, %c0_7], %13 {strides = array<i32>} : memref<1x1x8x8xf32, #tpu.memory_space<vmem>>, vector<1x1x8x8xf32>,
    %c1_i32 = arith.constant 1 : i32
    return
  }
  func.func @transform_0(%arg0: i32, %arg1: i32, %arg2: i32, %arg3: i32) -> (i32, i32, i32) {
    %c0_i32 = arith.constant 0 : i32
    %c0_i32_0 = arith.constant 0 : i32
    return %arg1, %arg2, %c0_i32 : i32, i32, i32
  }
  func.func @transform_1(%arg0: i32, %arg1: i32, %arg2: i32, %arg3: i32) -> (i32, i32) {
    %c0_i32 = arith.constant 0 : i32
    %c0_i32_0 = arith.constant 0 : i32
    return %c0_i32, %arg0 : i32, i32
  }
  func.func @transform_2(%arg0: i32, %arg1: i32, %arg2: i32, %arg3: i32) -> (i32, i32, i32) {
    %c0_i32 = arith.constant 0 : i32
    %c0_i32_0 = arith.constant 0 : i32
    return %arg1, %arg3, %c0_i32 : i32, i32, i32
  }
  func.func @transform_3(%arg0: i32, %arg1: i32, %arg2: i32, %arg3: i32) -> (i32, i32, i32, i32) {
    %c0_i32 = arith.constant 0 : i32
    return %arg1, %arg0, %arg2, %arg3 : i32, i32, i32, i32
  }
}

module attributes {stable_mosaic.version = 11 : i64} {
  func.func @_biaffine_tiled_kernel(%arg0: i32, %arg1: i32, %arg2: i32, %arg3: i32, %arg4: memref<1x8x128xbf16, #tpu.memory_space<vmem>>, %arg5: memref<128x128xbf16, #tpu.memory_space<vmem>>, %arg6: memref<1x8x128xbf16, #tpu.memory_space<vmem>>, %arg7: memref<1x1x8x8xf32, #tpu.memory_space<vmem>>, %arg8: memref<8x128xbf16, #tpu.memory_space<vmem>>) attributes {dimension_semantics = [#tpu.dimension_semantics<parallel>, #tpu.dimension_semantics<parallel>, #tpu.dimension_semantics<parallel>, #tpu.dimension_semantics<arbitrary>], iteration_bounds = array<i64: 1, 2, 1, 1>, scalar_prefetch = 0 : i64, scratch_operands = 1 : i64, tpu.core_type = #tpu.core_type<tc>, window_params = [{transform_indices = @transform_0, window_bounds = array<i64: 1, 8, 128>}, {transform_indices = @transform_1, window_bounds = array<i64: 128, 128>}, {transform_indices = @transform_2, window_bounds = array<i64: 1, 8, 128>}, {transform_indices = @transform_3, window_bounds = array<i64: 1, 1, 8, 8>}]} {
    %c0_i32 = arith.constant 0 : i32
    %0 = arith.cmpi eq, %arg3, %c0_i32 : i32
    %1 = arith.extui %0 : i1 to i32
    %c0_i32_0 = arith.constant 0 : i32
    %2 = arith.cmpi ne, %1, %c0_i32_0 : i32
    scf.if %2 {
      %c0_8 = arith.constant 0 : index
      %c0_9 = arith.constant 0 : index
      %c0_10 = arith.constant 0 : index
      %14 = vector.load %arg4[%c0_8, %c0_9, %c0_10] : memref<1x8x128xbf16, #tpu.memory_space<vmem>>, vector<1x8x128xbf16>
      %15 = vector.shape_cast %14 : vector<1x8x128xbf16> to vector<8x128xbf16>
      %c0_11 = arith.constant 0 : index
      %c0_12 = arith.constant 0 : index
      %16 = vector.load %arg5[%c0_11, %c0_12] : memref<128x128xbf16, #tpu.memory_space<vmem>>, vector<128x128xbf16>
      %cst_13 = arith.constant dense<0.000000e+00> : vector<8x128xf32>
      %17 = tpu.matmul %15, %16, %cst_13 {dimension_numbers = #tpu.dot_dimension_numbers<[1], [0], [0], [1], [0, 0, 1, 1], [], []>} : vector<8x128xbf16>, vector<128x128xbf16>, vector<8x128xf32> -> vector<8x128xf32>
      %18 = arith.truncf %17 : vector<8x128xf32> to vector<8x128xbf16>
      %c0_14 = arith.constant 0 : index
      %c0_15 = arith.constant 0 : index
      %19 = vector.load %arg8[%c0_14, %c0_15] : memref<8x128xbf16, #tpu.memory_space<vmem>>, vector<8x128xbf16>
      tpu.vector_store %arg8[%c0_14, %c0_15], %18 {strides = array<i32>} : memref<8x128xbf16, #tpu.memory_space<vmem>>, vector<8x128xbf16>,
    } else {
    }
    %c0 = arith.constant 0 : index
    %c0_1 = arith.constant 0 : index
    %c0_2 = arith.constant 0 : index
    %3 = vector.load %arg6[%c0, %c0_1, %c0_2] : memref<1x8x128xbf16, #tpu.memory_space<vmem>>, vector<1x8x128xbf16>
    %4 = vector.shape_cast %3 : vector<1x8x128xbf16> to vector<8x128xbf16>
    %c0_i32_3 = arith.constant 0 : i32
    %c128_i32 = arith.constant 128 : i32
    %5 = arith.muli %c0_i32_3, %c128_i32 : i32
    %6 = tpu.assume_multiple %5, 128 : i32
    %c0_4 = arith.constant 0 : index
    %7 = arith.index_cast %6 : i32 to index
    %8 = vector.load %arg8[%c0_4, %7] : memref<8x128xbf16, #tpu.memory_space<vmem>>, vector<8x128xbf16>
    %cst = arith.constant dense<0.000000e+00> : vector<8x8xf32>
    %9 = tpu.matmul %8, %4, %cst {dimension_numbers = #tpu.dot_dimension_numbers<[1], [1], [0], [0], [0, 0, 1, 0], [], []>} : vector<8x128xbf16>, vector<8x128xbf16>, vector<8x8xf32> -> vector<8x8xf32>
    %c0_5 = arith.constant 0 : index
    %10 = arith.index_cast %c0_i32_3 : i32 to index
    %c0_6 = arith.constant 0 : index
    %c0_7 = arith.constant 0 : index
    %11 = vector.load %arg7[%c0_5, %10, %c0_6, %c0_7] : memref<1x1x8x8xf32, #tpu.memory_space<vmem>>, vector<1x1x8x8xf32>
    %12 = vector.shape_cast %11 : vector<1x1x8x8xf32> to vector<8x8xf32>
    %13 = vector.shape_cast %9 : vector<8x8xf32> to vector<1x1x8x8xf32>
    tpu.vector_store %arg7[%c0_5, %10, %c0_6, %c0_7], %13 {strides = array<i32>} : memref<1x1x8x8xf32, #tpu.memory_space<vmem>>, vector<1x1x8x8xf32>,
    %c1_i32 = arith.constant 1 : i32
    return
  }
  func.func @transform_0(%arg0: i32, %arg1: i32, %arg2: i32, %arg3: i32) -> (i32, i32, i32) {
    %c0_i32 = arith.constant 0 : i32
    %c0_i32_0 = arith.constant 0 : i32
    return %arg1, %arg2, %c0_i32 : i32, i32, i32
  }
  func.func @transform_1(%arg0: i32, %arg1: i32, %arg2: i32, %arg3: i32) -> (i32, i32) {
    %c0_i32 = arith.constant 0 : i32
    %c0_i32_0 = arith.constant 0 : i32
    return %c0_i32, %arg0 : i32, i32
  }
  func.func @transform_2(%arg0: i32, %arg1: i32, %arg2: i32, %arg3: i32) -> (i32, i32, i32) {
    %c0_i32 = arith.constant 0 : i32
    %c0_i32_0 = arith.constant 0 : i32
    return %arg1, %arg3, %c0_i32 : i32, i32, i32
  }
  func.func @transform_3(%arg0: i32, %arg1: i32, %arg2: i32, %arg3: i32) -> (i32, i32, i32, i32) {
    %c0_i32 = arith.constant 0 : i32
    return %arg1, %arg0, %arg2, %arg3 : i32, i32, i32, i32
  }
}

</mosaic_0001>

<llo_original>
// kernel: tpu_custom_call.1
$region0: #{tpu_custom_call.1}
  #allocation0 [shape = 'u32[]', space=smem, size = 0x4, offset = 0x4, fixed_abs, tag = 'smem constant byte address 0x4 - core index']
  #allocation1 [shape = 'u32[144,128]{1,0:T(1,128)}', space=vmem, size = 0x12000, scoped, tag = 'internal scratch']
  #allocation2 [shape = 'bf16[8,128]{1,0:T(8,128)(2,1)}', space=vmem, size = 0x800, scoped, tag = 'scratch operand']
  %s0 = inlined_call_operand.hbm [shape: bf16[2,8,128], index: 0, kind: input, shape index: {}]
  %s1 = inlined_call_operand.hbm [shape: bf16[128,128], index: 1, kind: input, shape index: {}]
  %s2 = inlined_call_operand.hbm [shape: bf16[2,8,128], index: 2, kind: input, shape index: {}]
  %s3 = inlined_call_operand.hbm [shape: f32[2,1,8,8], index: 3, kind: output, shape index: {}]
  %s4 = sld [smem:[#allocation0]]
  $region61: #{tpu_custom_call.1} parent=0
    _
  %s6 = ssub.s32 1, %s4
  %s7 = scalar_select 0, %s6, %s4
  $region1: #{tpu_custom_call.1} parent=0
    #allocation3 [shape = 'u8[4096]{0}', space=vmem, size = 0x1000, scoped, tag = 'input window, operand 0']
    #allocation4 [shape = 's32[2]{0}', space=sflag, size = 0x8, scoped, tag = 'scoped memory for tpu_custom_call.1']
    #allocation5 [shape = 's32[2]{0}', space=sflag, size = 0x8, scoped, tag = 'scoped memory for tpu_custom_call.1']
    #allocation6 [shape = 'u8[32768]{0}', space=vmem, size = 0x8000, scoped, tag = 'input window, operand 1, single buffered']
    #allocation7 [shape = 's32[1]{0}', space=sflag, size = 0x4, scoped, tag = 'scoped memory for tpu_custom_call.1']
    #allocation8 [shape = 'u8[4096]{0}', space=vmem, size = 0x1000, scoped, tag = 'input window, operand 2']
    #allocation9 [shape = 'u8[8192]{0}', space=vmem, size = 0x2000, scoped, tag = 'output window, operand 0']
    %8 = vsyncpa [#allocation4], 0
    %s9 = scalar_lea.sflag [#allocation4], 1
    %10 = vsyncpa %s9, 0
    %11 = vsyncpa [#allocation7], 0
    %12 = vsyncpa [#allocation5], 0
    %s13 = scalar_lea.sflag [#allocation5], 1
    %14 = vsyncpa %s13, 0
    loop: start=0, step=1, limit=4
    $region2: #{tpu_custom_call.1} parent=1 // loop_pre_header
      _
    $region3: #{tpu_custom_call.1} parent=1 // loop_header
      %s16 = sphi 0, %s20
      %p17 = scmp.ge.s32.totalorder %s16, 4
      %s23 = sphi 0, %s49
      %s24 = sphi 0, %s45
      %s25 = sphi 0, %s41
      %s26 = sphi 0, %s37
      %s27 = sphi 0, %s23
      %s28 = sphi 0, %s24
      %s29 = sphi 0, %s25
      %s30 = sphi 0, %s26
      %s31 = sphi 0, %s27
      %s32 = sphi 0, %s28
      %s33 = sphi 0, %s29
      %s34 = sphi 0, %s30
      %s54 = sphi 0, %s56
      %s57 = sphi 0, %s54
      %s58 = sphi 0, %s57
      %s74 = sphi 0, %s58
      %s80 = sphi 0, %s82
      %s83 = sphi 0, %s80
      %s84 = sphi 0, %s83
      %s100 = sphi 0, %s84
      %s108 = sphi 0, %s110
      %s111 = sphi 0, %s108
      %s112 = sphi 0, %s111
      %s128 = sphi 0, %s112
      %s140 = sphi 0, %s142
      %s143 = sphi 0, %s140
      %s144 = sphi 0, %s143
      %s160 = sphi 0, %s144
    $region4: #{tpu_custom_call.1} parent=1 // loop_header_branch
      %19 = sbr.rel (%p17) target = $region8
    $region5: #{tpu_custom_call.1} parent=1 // loop_body
      %s21 = ssub.s32 %s16, 1
      %s22 = ssub.s32 %s16, 2
      %s35 = sadd.s32 1, %s26
      %p36 = scmp.ge.s32.totalorder %s35, 1
      %s37 = scalar_select %p36, 0, %s35
      %s38 = sadd.s32 1, %s25
      %s39 = scalar_select %p36, %s38, %s25
      %p40 = scmp.ge.s32.totalorder %s39, 1
      %s41 = scalar_select %p40, 0, %s39
      %s42 = sadd.s32 1, %s24
      %s43 = scalar_select %p40, %s42, %s24
      %p44 = scmp.ge.s32.totalorder %s43, 2
      %s45 = scalar_select %p44, 0, %s43
      %s46 = sadd.s32 1, %s23
      %s47 = scalar_select %p44, %s46, %s23
      %p48 = scmp.ge.s32.totalorder %s47, 1
      %s49 = scalar_select %p48, 0, %s47
      %s50 = ssub.s32 %s24, %s45
      %s51 = ssub.s32 %s25, %s41
      %s52 = sor.u32 %s50, %s51
      %p53 = scmp.eq.s32.totalorder %s52, 0
      %s55 = sadd.s32 %s54, 1
      %s56 = scalar_select %p53, %s54, %s55
      %p59 = pneg %p53
      %p60 = scmp.eq.s32.totalorder %s16, 1
      %p61 = por %p59, %p60
      %p62 = scmp.ne.s32.totalorder %s54, %s57
      %p63 = scmp.eq.s32.totalorder %s16, 0
      %p64 = por %p62, %p63
      %p65 = scmp.ne.s32.totalorder %s54, %s57
      %p66 = scmp.eq.s32.totalorder %s21, 1
      %p67 = por %p65, %p66
      %p68 = scmp.ne.s32.totalorder %s57, %s58
      %p69 = scmp.eq.s32.totalorder %s21, 0
      %p70 = por %p68, %p69
      %p71 = scmp.ne.s32.totalorder %s57, %s58
      %p72 = scmp.eq.s32.totalorder %s22, 1
      %p73 = por %p71, %p72
      %p75 = scmp.ne.s32.totalorder %s58, %s74
      %p76 = scmp.eq.s32.totalorder %s22, 0
      %p77 = por %p75, %p76
      %s78 = ssub.s32 %s23, %s49
      %p79 = scmp.eq.s32.totalorder %s78, 0
      %s81 = sadd.s32 %s80, 1
      %s82 = scalar_select %p79, %s80, %s81
      %p85 = pneg %p79
      %p86 = scmp.eq.s32.totalorder %s16, 1
      %p87 = por %p85, %p86
      %p88 = scmp.ne.s32.totalorder %s80, %s83
      %p89 = scmp.eq.s32.totalorder %s16, 0
      %p90 = por %p88, %p89
      %p91 = scmp.ne.s32.totalorder %s80, %s83
      %p92 = scmp.eq.s32.totalorder %s21, 1
      %p93 = por %p91, %p92
      %p94 = scmp.ne.s32.totalorder %s83, %s84
      %p95 = scmp.eq.s32.totalorder %s21, 0
      %p96 = por %p94, %p95
      %p97 = scmp.ne.s32.totalorder %s83, %s84
      %p98 = scmp.eq.s32.totalorder %s22, 1
      %p99 = por %p97, %p98
      %p101 = scmp.ne.s32.totalorder %s84, %s100
      %p102 = scmp.eq.s32.totalorder %s22, 0
      %p103 = por %p101, %p102
      %s104 = ssub.s32 %s24, %s45
      %s105 = ssub.s32 %s26, %s37
      %s106 = sor.u32 %s104, %s105
      %p107 = scmp.eq.s32.totalorder %s106, 0
      %s109 = sadd.s32 %s108, 1
      %s110 = scalar_select %p107, %s108, %s109
      %p113 = pneg %p107
      %p114 = scmp.eq.s32.totalorder %s16, 1
      %p115 = por %p113, %p114
      %p116 = scmp.ne.s32.totalorder %s108, %s111
      %p117 = scmp.eq.s32.totalorder %s16, 0
      %p118 = por %p116, %p117
      %p119 = scmp.ne.s32.totalorder %s108, %s111
      %p120 = scmp.eq.s32.totalorder %s21, 1
      %p121 = por %p119, %p120
      %p122 = scmp.ne.s32.totalorder %s111, %s112
      %p123 = scmp.eq.s32.totalorder %s21, 0
      %p124 = por %p122, %p123
      %p125 = scmp.ne.s32.totalorder %s111, %s112
      %p126 = scmp.eq.s32.totalorder %s22, 1
      %p127 = por %p125, %p126
      %p129 = scmp.ne.s32.totalorder %s112, %s128
      %p130 = scmp.eq.s32.totalorder %s22, 0
      %p131 = por %p129, %p130
      %s132 = ssub.s32 %s24, %s45
      %s133 = ssub.s32 %s23, %s49
      %s134 = sor.u32 %s132, %s133
      %s135 = ssub.s32 %s25, %s41
      %s136 = sor.u32 %s134, %s135
      %s137 = ssub.s32 %s26, %s37
      %s138 = sor.u32 %s136, %s137
      %p139 = scmp.eq.s32.totalorder %s138, 0
      %s141 = sadd.s32 %s140, 1
      %s142 = scalar_select %p139, %s140, %s141
      %p145 = pneg %p139
      %p146 = scmp.eq.s32.totalorder %s16, 1
      %p147 = por %p145, %p146
      %p148 = scmp.ne.s32.totalorder %s140, %s143
      %p149 = scmp.eq.s32.totalorder %s16, 0
      %p150 = por %p148, %p149
      %p151 = scmp.ne.s32.totalorder %s140, %s143
      %p152 = scmp.eq.s32.totalorder %s21, 1
      %p153 = por %p151, %p152
      %p154 = scmp.ne.s32.totalorder %s143, %s144
      %p155 = scmp.eq.s32.totalorder %s21, 0
      %p156 = por %p154, %p155
      %p157 = scmp.ne.s32.totalorder %s143, %s144
      %p158 = scmp.eq.s32.totalorder %s22, 1
      %p159 = por %p157, %p158
      %p161 = scmp.ne.s32.totalorder %s144, %s160
      %p162 = scmp.eq.s32.totalorder %s22, 0
      %p163 = por %p161, %p162
      %p164 = scmp.le.s32.totalorder 1, %s16
      %p165 = scmp.lt.s32.totalorder %s16, 3
      %p166 = pnand %p164, %p165
      %p167 = pneg %p166
      // Predicated region
      $region9: #{tpu_custom_call.1} parent=5 // pred_check
        _
      $region10: #{tpu_custom_call.1} parent=5 // pred_check_branch
        %169 = sbr.rel (%p166) target = $region12
      $region11: #{tpu_custom_call.1} parent=5 // pred_region
        %s170 = ssub.s32 %s16, 1
        // Predicated region
        $region13: #{tpu_custom_call.1} parent=11 // pred_check
          %p171 = pneg %p96
        $region14: #{tpu_custom_call.1} parent=11 // pred_check_branch
          %173 = sbr.rel (%p171) target = $region16
        $region15: #{tpu_custom_call.1} parent=11 // pred_region
          %s175 = ssub.s32 1024, 1024
          %176 = vsyncadd [#allocation7], %s175
          %s177 = smul.addr %s27, 64
          %s178 = scalar_lea.hbm %s1, %s177
          %s179 = sshll.u32 [#allocation6], 4
          %s180 = int_to_ptr.vmem [resolvable:$true] %s179
          %185 = dma.hbm_to_vmem [thread:$0]  %s178, 1024, %s180, [#allocation7], 64, 64, 4
        $region16: #{tpu_custom_call.1} parent=11 // pred_fallthru
          _
      $region12: #{tpu_custom_call.1} parent=5 // pred_fallthru
        _
      %p186 = scmp.lt.s32.totalorder %s16, 2
      // Predicated region
      $region17: #{tpu_custom_call.1} parent=5 // pred_check
        %p187 = pneg %p186
      $region18: #{tpu_custom_call.1} parent=5 // pred_check_branch
        %189 = sbr.rel (%p187) target = $region20
      $region19: #{tpu_custom_call.1} parent=5 // pred_region
        // Predicated region
        $region21: #{tpu_custom_call.1} parent=19 // pred_check
          %p190 = pneg %p64
        $region22: #{tpu_custom_call.1} parent=19 // pred_check_branch
          %192 = sbr.rel (%p190) target = $region24
        $region23: #{tpu_custom_call.1} parent=19 // pred_region
          %s193 = sand.u32 %s16, 1
          %s194 = scalar_lea.sflag [#allocation4], %s193
          %s195 = sand.u32 %s54, 1
          %s196 = smul.addr %s195, 4
          %s197 = scalar_lea.vmem [#allocation3], %s196
          %s199 = ssub.s32 64, 64
          %200 = vsyncadd %s194, %s199
          %s201 = sadd.s32 %s25, %s24
          %s202 = smul.addr %s201, 64
          %s203 = scalar_lea.hbm %s0, %s202
          %s205 = sshll.u32 %s197, 4
          %s206 = int_to_ptr.vmem [resolvable:$true] %s205
          %208 = dma.hbm_to_vmem [thread:$0]  %s203, 64, %s206, %s194
        $region24: #{tpu_custom_call.1} parent=19 // pred_fallthru
          _
        // Predicated region
        $region25: #{tpu_custom_call.1} parent=19 // pred_check
          %p209 = pneg %p118
        $region26: #{tpu_custom_call.1} parent=19 // pred_check_branch
          %211 = sbr.rel (%p209) target = $region28
        $region27: #{tpu_custom_call.1} parent=19 // pred_region
          %s212 = sand.u32 %s16, 1
          %s213 = scalar_lea.sflag [#allocation4], %s212
          %s214 = sand.u32 %s108, 1
          %s215 = smul.addr %s214, 4
          %s216 = scalar_lea.vmem [#allocation8], %s215
          %s218 = ssub.s32 64, 64
          %219 = vsyncadd %s213, %s218
          %s220 = sadd.s32 %s26, %s24
          %s221 = smul.addr %s220, 64
          %s222 = scalar_lea.hbm %s2, %s221
          %s224 = sshll.u32 %s216, 4
          %s225 = int_to_ptr.vmem [resolvable:$true] %s224
          %227 = dma.hbm_to_vmem [thread:$0]  %s222, 64, %s225, %s213
        $region28: #{tpu_custom_call.1} parent=19 // pred_fallthru
          _
      $region20: #{tpu_custom_call.1} parent=5 // pred_fallthru
        _
      %p228 = scmp.le.s32.totalorder 1, %s16
      %p229 = scmp.lt.s32.totalorder %s16, 3
      %p230 = pnand %p228, %p229
      %p231 = pneg %p230
      // Predicated region
      $region29: #{tpu_custom_call.1} parent=5 // pred_check
        _
      $region30: #{tpu_custom_call.1} parent=5 // pred_check_branch
        %233 = sbr.rel (%p230) target = $region32
      $region31: #{tpu_custom_call.1} parent=5 // pred_region
        %s234 = ssub.s32 %s16, 1
        %s235 = sand.u32 %s21, 1
        %s236 = scalar_lea.sflag [#allocation4], %s235
        %s237 = sand.u32 %s57, 1
        %s238 = smul.addr %s237, 4
        %s239 = scalar_lea.vmem [#allocation3], %s238
        // Predicated region
        $region33: #{tpu_custom_call.1} parent=31 // pred_check
          %p240 = pneg %p70
        $region34: #{tpu_custom_call.1} parent=31 // pred_check_branch
          %242 = sbr.rel (%p240) target = $region36
        $region35: #{tpu_custom_call.1} parent=31 // pred_region
          %243 = dma.done %s236, 64
        $region36: #{tpu_custom_call.1} parent=31 // pred_fallthru
          _
        // Predicated region
        $region37: #{tpu_custom_call.1} parent=31 // pred_check
          %p244 = pneg %p96
        $region38: #{tpu_custom_call.1} parent=31 // pred_check_branch
          %246 = sbr.rel (%p244) target = $region40
        $region39: #{tpu_custom_call.1} parent=31 // pred_region
          %247 = dma.done [#allocation7], 1024
        $region40: #{tpu_custom_call.1} parent=31 // pred_fallthru
          _
        %s248 = sand.u32 %s21, 1
        %s249 = scalar_lea.sflag [#allocation4], %s248
        %s250 = sand.u32 %s111, 1
        %s251 = smul.addr %s250, 4
        %s252 = scalar_lea.vmem [#allocation8], %s251
        // Predicated region
        $region41: #{tpu_custom_call.1} parent=31 // pred_check
          %p253 = pneg %p124
        $region42: #{tpu_custom_call.1} parent=31 // pred_check_branch
          %255 = sbr.rel (%p253) target = $region44
        $region43: #{tpu_custom_call.1} parent=31 // pred_region
          %256 = dma.done %s249, 64
        $region44: #{tpu_custom_call.1} parent=31 // pred_fallthru
          _
        %s257 = sand.u32 %s21, 1
        %s258 = scalar_lea.sflag [#allocation4], %s257
        %s259 = sand.u32 %s57, 1
        %s260 = smul.addr %s259, 4
        %s261 = scalar_lea.vmem [#allocation3], %s260
        %p262 = pneg %p70
        %p263 = pneg %p67
        %p264 = pneg %p96
        %p265 = pneg %p93
        %s266 = sand.u32 %s21, 1
        %s267 = scalar_lea.sflag [#allocation4], %s266
        %s268 = sand.u32 %s111, 1
        %s269 = smul.addr %s268, 4
        %s270 = scalar_lea.vmem [#allocation8], %s269
        %p271 = pneg %p124
        %p272 = pneg %p121
        %p273 = pneg %p156
        %p274 = pneg %p153
        %s275 = sand.u32 %s143, 1
        %s276 = scalar_lea.sflag [#allocation5], %s275
        %s277 = sand.u32 %s143, 1
        %s278 = smul.addr %s277, 8
        %s279 = scalar_lea.vmem [#allocation9], %s278
        %p281 = scmp.eq.s32.totalorder %s30, 0
        // Predicated region
        $region45: #{tpu_custom_call.1} parent=31 // pred_check
          %p282 = pneg %p281
        $region46: #{tpu_custom_call.1} parent=31 // pred_check_branch
          %284 = sbr.rel (%p282) target = $region48
        $region47: #{tpu_custom_call.1} parent=31 // pred_region
          %v285 = vld [vmem:[%s239] sm:$0xf]
          %v286 = vld [vmem:[#allocation6] sm:$0xf]
          %v287 = vld [vmem:[#allocation6 + $0x4] sm:$0xf]
          %v288 = vld [vmem:[#allocation6 + $0x8] sm:$0xf]
          %v289 = vld [vmem:[#allocation6 + $0xc] sm:$0xf]
          %v290 = vld [vmem:[#allocation6 + $0x10] sm:$0xf]
          %v291 = vld [vmem:[#allocation6 + $0x14] sm:$0xf]
          %v292 = vld [vmem:[#allocation6 + $0x18] sm:$0xf]
          %v293 = vld [vmem:[#allocation6 + $0x1c] sm:$0xf]
          %v294 = vld [vmem:[#allocation6 + $0x20] sm:$0xf]
          %v295 = vld [vmem:[#allocation6 + $0x24] sm:$0xf]
          %v296 = vld [vmem:[#allocation6 + $0x28] sm:$0xf]
          %v297 = vld [vmem:[#allocation6 + $0x2c] sm:$0xf]
          %v298 = vld [vmem:[#allocation6 + $0x30] sm:$0xf]
          %v299 = vld [vmem:[#allocation6 + $0x34] sm:$0xf]
          %v300 = vld [vmem:[#allocation6 + $0x38] sm:$0xf]
          %v301 = vld [vmem:[#allocation6 + $0x3c] sm:$0xf]
          %v318 = vunpack.c.l.b16 %v286
          %v319 = vunpack.c.l.b16 %v287
          %v320 = vunpack.c.l.b16 %v288
          %v321 = vunpack.c.l.b16 %v289
          %v322 = vunpack.c.l.b16 %v290
          %v323 = vunpack.c.l.b16 %v291
          %v324 = vunpack.c.l.b16 %v292
          %v325 = vunpack.c.l.b16 %v293
          %v326 = vunpack.c.l.b16 %v294
          %v327 = vunpack.c.l.b16 %v295
          %v328 = vunpack.c.l.b16 %v296
          %v329 = vunpack.c.l.b16 %v297
          %v330 = vunpack.c.l.b16 %v298
          %v331 = vunpack.c.l.b16 %v299
          %v332 = vunpack.c.l.b16 %v300
          %v333 = vunpack.c.l.b16 %v301
          %v334 = vpack.c.b16 %v319, %v318
          %v335 = vpack.c.b16 %v321, %v320
          %v336 = vpack.c.b16 %v323, %v322
          %v337 = vpack.c.b16 %v325, %v324
          %v338 = vpack.c.b16 %v327, %v326
          %v339 = vpack.c.b16 %v329, %v328
          %v340 = vpack.c.b16 %v331, %v330
          %v341 = vpack.c.b16 %v333, %v332
          %350 = vmatprep.subr.bf16.mxu0 0
          %351 = vmatpush1.bf16.msra.mxu0 %v334
          %352 = vmatprep.subr.bf16.mxu0 0
          %353 = vmatpush1.bf16.msra.mxu0 %v335
          %354 = vmatprep.subr.bf16.mxu0 0
          %355 = vmatpush1.bf16.msra.mxu0 %v336
          %356 = vmatprep.subr.bf16.mxu0 0
          %357 = vmatpush1.bf16.msra.mxu0 %v337
          %358 = vmatprep.subr.bf16.mxu0 0
          %359 = vmatpush1.bf16.msra.mxu0 %v338
          %360 = vmatprep.subr.bf16.mxu0 0
          %361 = vmatpush1.bf16.msra.mxu0 %v339
          %362 = vmatprep.subr.bf16.mxu0 0
          %363 = vmatpush1.bf16.msra.mxu0 %v340
          %364 = vmatprep.subr.bf16.mxu0 0
          %365 = vmatpush1.bf16.msra.mxu0 %v341
          %366 = vmatprep.subr.bf16.mxu0 0
          %367 = vmatpush1.bf16.msra.mxu0 0
          %368 = vmatprep.subr.bf16.mxu0 0
          %369 = vmatpush1.bf16.msra.mxu0 0
          %370 = vmatprep.subr.bf16.mxu0 0
          %371 = vmatpush1.bf16.msra.mxu0 0
          %372 = vmatprep.subr.bf16.mxu0 0
          %373 = vmatpush1.bf16.msra.mxu0 0
          %374 = vmatprep.subr.bf16.mxu0 0
          %375 = vmatpush1.bf16.msra.mxu0 0
          %376 = vmatprep.subr.bf16.mxu0 0
          %377 = vmatpush1.bf16.msra.mxu0 0
          %378 = vmatprep.subr.bf16.mxu0 0
          %379 = vmatpush1.bf16.msra.mxu0 0
          %380 = vmatprep.subr.bf16.mxu0 0
          %381 = vmatpush1.bf16.msra.mxu0 0
          %382 = vmatprep.mubr.bf16.mxu0 0
          %383 = vmatmul.mubr.bf16.gmra.mrb[0].mxu0 %v285
          %v384 = vpop.f32.mrb[0].mxu0
          %v385 = vadd.f32 0.0, %v384
          %v386 = vpop.f32.mrb[0].mxu0
          %v387 = vpop.f32.mrb[0].mxu0
          %v388 = vpop.f32.mrb[0].mxu0
          %389 = vdwg.mxu0
          %v390 = vpack.c.bf16 %v385, %v385
          %391 = vst [vmem:[#allocation2] sm:$0xf] %v390
        $region48: #{tpu_custom_call.1} parent=31 // pred_fallthru
          _
        %v392 = vld [vmem:[%s252] sm:$0xf]
        %v393 = vld [vmem:[#allocation2] sm:$0xf]
        %394 = vmatprep.subr.bf16.mxu0 0
        %395 = vmatpush1.bf16.xpose.msra.mxu0 %v392
        %396 = vmatprep.subr.bf16.mxu0 0
        %397 = vmatpush1.bf16.xpose.msra.mxu0 0
        %398 = vmatprep.subr.bf16.mxu0 0
        %399 = vmatpush1.bf16.xpose.msra.mxu0 0
        %400 = vmatprep.subr.bf16.mxu0 0
        %401 = vmatpush1.bf16.xpose.msra.mxu0 0
        %402 = vmatprep.subr.bf16.mxu0 0
        %403 = vmatpush1.bf16.xpose.msra.mxu0 0
        %404 = vmatprep.subr.bf16.mxu0 0
        %405 = vmatpush1.bf16.xpose.msra.mxu0 0
        %406 = vmatprep.subr.bf16.mxu0 0
        %407 = vmatpush1.bf16.xpose.msra.mxu0 0
        %408 = vmatprep.subr.bf16.mxu0 0
        %409 = vmatpush1.bf16.xpose.msra.mxu0 0
        %410 = vmatprep.subr.bf16.mxu0 0
        %411 = vmatpush1.bf16.xpose.msra.mxu0 0
        %412 = vmatprep.subr.bf16.mxu0 0
        %413 = vmatpush1.bf16.xpose.msra.mxu0 0
        %414 = vmatprep.subr.bf16.mxu0 0
        %415 = vmatpush1.bf16.xpose.msra.mxu0 0
        %416 = vmatprep.subr.bf16.mxu0 0
        %417 = vmatpush1.bf16.xpose.msra.mxu0 0
        %418 = vmatprep.subr.bf16.mxu0 0
        %419 = vmatpush1.bf16.xpose.msra.mxu0 0
        %420 = vmatprep.subr.bf16.mxu0 0
        %421 = vmatpush1.bf16.xpose.msra.mxu0 0
        %422 = vmatprep.subr.bf16.mxu0 0
        %423 = vmatpush1.bf16.xpose.msra.mxu0 0
        %424 = vmatprep.subr.bf16.mxu0 0
        %425 = vmatpush1.bf16.xpose.msra.mxu0 0
        %426 = vmatprep.mubr.bf16.mxu0 0
        %427 = vmatmul.mubr.bf16.gmra.mrb[0].mxu0 %v393
        %v428 = vpop.f32.mrb[0].mxu0
        %v429 = vadd.f32 0.0, %v428
        %v430 = vpop.f32.mrb[0].mxu0
        %v431 = vpop.f32.mrb[0].mxu0
        %v432 = vpop.f32.mrb[0].mxu0
        %433 = vdwg.mxu0
        %vm434 = vcmask 64512
        %435 = vst.msk [vmem:[%s279] sm:$0xff] %vm434, %v429
        %s436 = sand.u32 %s143, 1
        %s437 = scalar_lea.sflag [#allocation5], %s436
        %s438 = sand.u32 %s143, 1
        %s439 = smul.addr %s438, 8
        %s440 = scalar_lea.vmem [#allocation9], %s439
        // Predicated region
        $region49: #{tpu_custom_call.1} parent=31 // pred_check
          %p441 = pneg %p153
        $region50: #{tpu_custom_call.1} parent=31 // pred_check_branch
          %443 = sbr.rel (%p441) target = $region52
        $region51: #{tpu_custom_call.1} parent=31 // pred_region
          %s445 = ssub.s32 128, 128
          %446 = vsyncadd %s437, %s445
          %s447 = sadd.s32 %s30, %s29
          %s448 = sadd.s32 %s447, %s27
          %s449 = sadd.s32 %s448, %s28
          %s450 = smul.addr %s449, 128
          %s451 = scalar_lea.hbm %s3, %s450
          %s453 = sshll.u32 %s440, 4
          %s454 = int_to_ptr.vmem [resolvable:$true] %s453
          %456 = dma.vmem_to_hbm [thread:$0]  %s454, 128, %s451, %s437
        $region52: #{tpu_custom_call.1} parent=31 // pred_fallthru
          _
      $region32: #{tpu_custom_call.1} parent=5 // pred_fallthru
        _
      %p457 = scmp.le.s32.totalorder 2, %s16
      // Predicated region
      $region53: #{tpu_custom_call.1} parent=5 // pred_check
        %p458 = pneg %p457
      $region54: #{tpu_custom_call.1} parent=5 // pred_check_branch
        %460 = sbr.rel (%p458) target = $region56
      $region55: #{tpu_custom_call.1} parent=5 // pred_region
        %s461 = ssub.s32 %s16, 2
        // Predicated region
        $region57: #{tpu_custom_call.1} parent=55 // pred_check
          %p462 = pneg %p159
        $region58: #{tpu_custom_call.1} parent=55 // pred_check_branch
          %464 = sbr.rel (%p462) target = $region60
        $region59: #{tpu_custom_call.1} parent=55 // pred_region
          %s465 = sand.u32 %s144, 1
          %s466 = scalar_lea.sflag [#allocation5], %s465
          %s467 = sand.u32 %s144, 1
          %s468 = smul.addr %s467, 8
          %s469 = scalar_lea.vmem [#allocation9], %s468
          %470 = dma.done %s466, 128
        $region60: #{tpu_custom_call.1} parent=55 // pred_fallthru
          _
      $region56: #{tpu_custom_call.1} parent=5 // pred_fallthru
        _
    $region6: #{tpu_custom_call.1} parent=1 // loop_footer
      %s20 = sadd.s32 1, %s16
    $region7: #{tpu_custom_call.1} parent=1 // loop_footer_branch
      %15 = sbr.rel target = $region3
    $region8: #{tpu_custom_call.1} parent=1 // loop_exit
      _
    %471 = vsyncpa [#allocation4], 1
    %s472 = scalar_lea.sflag [#allocation4], 1
    %473 = vsyncpa %s472, 1
    %474 = vsyncpa [#allocation7], 1
    %475 = vsyncpa [#allocation5], 1
    %s476 = scalar_lea.sflag [#allocation5], 1
    %477 = vsyncpa %s476, 1

// kernel: tpu_custom_call.1
$region0: #{tpu_custom_call.1}
  #allocation0 [shape = 'u32[]', space=smem, size = 0x4, offset = 0x4, fixed_abs, tag = 'smem constant byte address 0x4 - core index']
  #allocation1 [shape = 'u32[144,128]{1,0:T(1,128)}', space=vmem, size = 0x12000, scoped, tag = 'internal scratch']
  #allocation2 [shape = 'bf16[8,128]{1,0:T(8,128)(2,1)}', space=vmem, size = 0x800, scoped, tag = 'scratch operand']
  %s0 = inlined_call_operand.hbm [shape: bf16[2,8,128], index: 0, kind: input, shape index: {}]
  %s1 = inlined_call_operand.hbm [shape: bf16[128,128], index: 1, kind: input, shape index: {}]
  %s2 = inlined_call_operand.hbm [shape: bf16[2,8,128], index: 2, kind: input, shape index: {}]
  %s3 = inlined_call_operand.hbm [shape: f32[2,1,8,8], index: 3, kind: output, shape index: {}]
  %s4 = sld [smem:[#allocation0]]
  $region61: #{tpu_custom_call.1} parent=0
    _
  %s6 = ssub.s32 1, %s4
  %s7 = scalar_select 0, %s6, %s4
  $region1: #{tpu_custom_call.1} parent=0
    #allocation3 [shape = 'u8[4096]{0}', space=vmem, size = 0x1000, scoped, tag = 'input window, operand 0']
    #allocation4 [shape = 's32[2]{0}', space=sflag, size = 0x8, scoped, tag = 'scoped memory for tpu_custom_call.1']
    #allocation5 [shape = 's32[2]{0}', space=sflag, size = 0x8, scoped, tag = 'scoped memory for tpu_custom_call.1']
    #allocation6 [shape = 'u8[32768]{0}', space=vmem, size = 0x8000, scoped, tag = 'input window, operand 1, single buffered']
    #allocation7 [shape = 's32[1]{0}', space=sflag, size = 0x4, scoped, tag = 'scoped memory for tpu_custom_call.1']
    #allocation8 [shape = 'u8[4096]{0}', space=vmem, size = 0x1000, scoped, tag = 'input window, operand 2']
    #allocation9 [shape = 'u8[8192]{0}', space=vmem, size = 0x2000, scoped, tag = 'output window, operand 0']
    %8 = vsyncpa [#allocation4], 0
    %s9 = scalar_lea.sflag [#allocation4], 1
    %10 = vsyncpa %s9, 0
    %11 = vsyncpa [#allocation7], 0
    %12 = vsyncpa [#allocation5], 0
    %s13 = scalar_lea.sflag [#allocation5], 1
    %14 = vsyncpa %s13, 0
    loop: start=0, step=1, limit=4
    $region2: #{tpu_custom_call.1} parent=1 // loop_pre_header
      _
    $region3: #{tpu_custom_call.1} parent=1 // loop_header
      %s16 = sphi 0, %s20
      %p17 = scmp.ge.s32.totalorder %s16, 4
      %s23 = sphi 0, %s49
      %s24 = sphi 0, %s45
      %s25 = sphi 0, %s41
      %s26 = sphi 0, %s37
      %s27 = sphi 0, %s23
      %s28 = sphi 0, %s24
      %s29 = sphi 0, %s25
      %s30 = sphi 0, %s26
      %s31 = sphi 0, %s27
      %s32 = sphi 0, %s28
      %s33 = sphi 0, %s29
      %s34 = sphi 0, %s30
      %s54 = sphi 0, %s56
      %s57 = sphi 0, %s54
      %s58 = sphi 0, %s57
      %s74 = sphi 0, %s58
      %s80 = sphi 0, %s82
      %s83 = sphi 0, %s80
      %s84 = sphi 0, %s83
      %s100 = sphi 0, %s84
      %s108 = sphi 0, %s110
      %s111 = sphi 0, %s108
      %s112 = sphi 0, %s111
      %s128 = sphi 0, %s112
      %s140 = sphi 0, %s142
      %s143 = sphi 0, %s140
      %s144 = sphi 0, %s143
      %s160 = sphi 0, %s144
    $region4: #{tpu_custom_call.1} parent=1 // loop_header_branch
      %19 = sbr.rel (%p17) target = $region8
    $region5: #{tpu_custom_call.1} parent=1 // loop_body
      %s21 = ssub.s32 %s16, 1
      %s22 = ssub.s32 %s16, 2
      %s35 = sadd.s32 1, %s26
      %p36 = scmp.ge.s32.totalorder %s35, 1
      %s37 = scalar_select %p36, 0, %s35
      %s38 = sadd.s32 1, %s25
      %s39 = scalar_select %p36, %s38, %s25
      %p40 = scmp.ge.s32.totalorder %s39, 1
      %s41 = scalar_select %p40, 0, %s39
      %s42 = sadd.s32 1, %s24
      %s43 = scalar_select %p40, %s42, %s24
      %p44 = scmp.ge.s32.totalorder %s43, 2
      %s45 = scalar_select %p44, 0, %s43
      %s46 = sadd.s32 1, %s23
      %s47 = scalar_select %p44, %s46, %s23
      %p48 = scmp.ge.s32.totalorder %s47, 1
      %s49 = scalar_select %p48, 0, %s47
      %s50 = ssub.s32 %s24, %s45
      %s51 = ssub.s32 %s25, %s41
      %s52 = sor.u32 %s50, %s51
      %p53 = scmp.eq.s32.totalorder %s52, 0
      %s55 = sadd.s32 %s54, 1
      %s56 = scalar_select %p53, %s54, %s55
      %p59 = pneg %p53
      %p60 = scmp.eq.s32.totalorder %s16, 1
      %p61 = por %p59, %p60
      %p62 = scmp.ne.s32.totalorder %s54, %s57
      %p63 = scmp.eq.s32.totalorder %s16, 0
      %p64 = por %p62, %p63
      %p65 = scmp.ne.s32.totalorder %s54, %s57
      %p66 = scmp.eq.s32.totalorder %s21, 1
      %p67 = por %p65, %p66
      %p68 = scmp.ne.s32.totalorder %s57, %s58
      %p69 = scmp.eq.s32.totalorder %s21, 0
      %p70 = por %p68, %p69
      %p71 = scmp.ne.s32.totalorder %s57, %s58
      %p72 = scmp.eq.s32.totalorder %s22, 1
      %p73 = por %p71, %p72
      %p75 = scmp.ne.s32.totalorder %s58, %s74
      %p76 = scmp.eq.s32.totalorder %s22, 0
      %p77 = por %p75, %p76
      %s78 = ssub.s32 %s23, %s49
      %p79 = scmp.eq.s32.totalorder %s78, 0
      %s81 = sadd.s32 %s80, 1
      %s82 = scalar_select %p79, %s80, %s81
      %p85 = pneg %p79
      %p86 = scmp.eq.s32.totalorder %s16, 1
      %p87 = por %p85, %p86
      %p88 = scmp.ne.s32.totalorder %s80, %s83
      %p89 = scmp.eq.s32.totalorder %s16, 0
      %p90 = por %p88, %p89
      %p91 = scmp.ne.s32.totalorder %s80, %s83
      %p92 = scmp.eq.s32.totalorder %s21, 1
      %p93 = por %p91, %p92
      %p94 = scmp.ne.s32.totalorder %s83, %s84
      %p95 = scmp.eq.s32.totalorder %s21, 0
      %p96 = por %p94, %p95
      %p97 = scmp.ne.s32.totalorder %s83, %s84
      %p98 = scmp.eq.s32.totalorder %s22, 1
      %p99 = por %p97, %p98
      %p101 = scmp.ne.s32.totalorder %s84, %s100
      %p102 = scmp.eq.s32.totalorder %s22, 0
      %p103 = por %p101, %p102
      %s104 = ssub.s32 %s24, %s45
      %s105 = ssub.s32 %s26, %s37
      %s106 = sor.u32 %s104, %s105
      %p107 = scmp.eq.s32.totalorder %s106, 0
      %s109 = sadd.s32 %s108, 1
      %s110 = scalar_select %p107, %s108, %s109
      %p113 = pneg %p107
      %p114 = scmp.eq.s32.totalorder %s16, 1
      %p115 = por %p113, %p114
      %p116 = scmp.ne.s32.totalorder %s108, %s111
      %p117 = scmp.eq.s32.totalorder %s16, 0
      %p118 = por %p116, %p117
      %p119 = scmp.ne.s32.totalorder %s108, %s111
      %p120 = scmp.eq.s32.totalorder %s21, 1
      %p121 = por %p119, %p120
      %p122 = scmp.ne.s32.totalorder %s111, %s112
      %p123 = scmp.eq.s32.totalorder %s21, 0
      %p124 = por %p122, %p123
      %p125 = scmp.ne.s32.totalorder %s111, %s112
      %p126 = scmp.eq.s32.totalorder %s22, 1
      %p127 = por %p125, %p126
      %p129 = scmp.ne.s32.totalorder %s112, %s128
      %p130 = scmp.eq.s32.totalorder %s22, 0
      %p131 = por %p129, %p130
      %s132 = ssub.s32 %s24, %s45
      %s133 = ssub.s32 %s23, %s49
      %s134 = sor.u32 %s132, %s133
      %s135 = ssub.s32 %s25, %s41
      %s136 = sor.u32 %s134, %s135
      %s137 = ssub.s32 %s26, %s37
      %s138 = sor.u32 %s136, %s137
      %p139 = scmp.eq.s32.totalorder %s138, 0
      %s141 = sadd.s32 %s140, 1
      %s142 = scalar_select %p139, %s140, %s141
      %p145 = pneg %p139
      %p146 = scmp.eq.s32.totalorder %s16, 1
      %p147 = por %p145, %p146
      %p148 = scmp.ne.s32.totalorder %s140, %s143
      %p149 = scmp.eq.s32.totalorder %s16, 0
      %p150 = por %p148, %p149
      %p151 = scmp.ne.s32.totalorder %s140, %s143
      %p152 = scmp.eq.s32.totalorder %s21, 1
      %p153 = por %p151, %p152
      %p154 = scmp.ne.s32.totalorder %s143, %s144
      %p155 = scmp.eq.s32.totalorder %s21, 0
      %p156 = por %p154, %p155
      %p157 = scmp.ne.s32.totalorder %s143, %s144
      %p158 = scmp.eq.s32.totalorder %s22, 1
      %p159 = por %p157, %p158
      %p161 = scmp.ne.s32.totalorder %s144, %s160
      %p162 = scmp.eq.s32.totalorder %s22, 0
      %p163 = por %p161, %p162
      %p164 = scmp.le.s32.totalorder 1, %s16
      %p165 = scmp.lt.s32.totalorder %s16, 3
      %p166 = pnand %p164, %p165
      %p167 = pneg %p166
      // Predicated region
      $region9: #{tpu_custom_call.1} parent=5 // pred_check
        _
      $region10: #{tpu_custom_call.1} parent=5 // pred_check_branch
        %169 = sbr.rel (%p166) target = $region12
      $region11: #{tpu_custom_call.1} parent=5 // pred_region
        %s170 = ssub.s32 %s16, 1
        // Predicated region
        $region13: #{tpu_custom_call.1} parent=11 // pred_check
          %p171 = pneg %p96
        $region14: #{tpu_custom_call.1} parent=11 // pred_check_branch
          %173 = sbr.rel (%p171) target = $region16
        $region15: #{tpu_custom_call.1} parent=11 // pred_region
          %s175 = ssub.s32 1024, 1024
          %176 = vsyncadd [#allocation7], %s175
          %s177 = smul.addr %s27, 64
          %s178 = scalar_lea.hbm %s1, %s177
          %s179 = sshll.u32 [#allocation6], 4
          %s180 = int_to_ptr.vmem [resolvable:$true] %s179
          %185 = dma.hbm_to_vmem [thread:$0]  %s178, 1024, %s180, [#allocation7], 64, 64, 4
        $region16: #{tpu_custom_call.1} parent=11 // pred_fallthru
          _
      $region12: #{tpu_custom_call.1} parent=5 // pred_fallthru
        _
      %p186 = scmp.lt.s32.totalorder %s16, 2
      // Predicated region
      $region17: #{tpu_custom_call.1} parent=5 // pred_check
        %p187 = pneg %p186
      $region18: #{tpu_custom_call.1} parent=5 // pred_check_branch
        %189 = sbr.rel (%p187) target = $region20
      $region19: #{tpu_custom_call.1} parent=5 // pred_region
        // Predicated region
        $region21: #{tpu_custom_call.1} parent=19 // pred_check
          %p190 = pneg %p64
        $region22: #{tpu_custom_call.1} parent=19 // pred_check_branch
          %192 = sbr.rel (%p190) target = $region24
        $region23: #{tpu_custom_call.1} parent=19 // pred_region
          %s193 = sand.u32 %s16, 1
          %s194 = scalar_lea.sflag [#allocation4], %s193
          %s195 = sand.u32 %s54, 1
          %s196 = smul.addr %s195, 4
          %s197 = scalar_lea.vmem [#allocation3], %s196
          %s199 = ssub.s32 64, 64
          %200 = vsyncadd %s194, %s199
          %s201 = sadd.s32 %s25, %s24
          %s202 = smul.addr %s201, 64
          %s203 = scalar_lea.hbm %s0, %s202
          %s205 = sshll.u32 %s197, 4
          %s206 = int_to_ptr.vmem [resolvable:$true] %s205
          %208 = dma.hbm_to_vmem [thread:$0]  %s203, 64, %s206, %s194
        $region24: #{tpu_custom_call.1} parent=19 // pred_fallthru
          _
        // Predicated region
        $region25: #{tpu_custom_call.1} parent=19 // pred_check
          %p209 = pneg %p118
        $region26: #{tpu_custom_call.1} parent=19 // pred_check_branch
          %211 = sbr.rel (%p209) target = $region28
        $region27: #{tpu_custom_call.1} parent=19 // pred_region
          %s212 = sand.u32 %s16, 1
          %s213 = scalar_lea.sflag [#allocation4], %s212
          %s214 = sand.u32 %s108, 1
          %s215 = smul.addr %s214, 4
          %s216 = scalar_lea.vmem [#allocation8], %s215
          %s218 = ssub.s32 64, 64
          %219 = vsyncadd %s213, %s218
          %s220 = sadd.s32 %s26, %s24
          %s221 = smul.addr %s220, 64
          %s222 = scalar_lea.hbm %s2, %s221
          %s224 = sshll.u32 %s216, 4
          %s225 = int_to_ptr.vmem [resolvable:$true] %s224
          %227 = dma.hbm_to_vmem [thread:$0]  %s222, 64, %s225, %s213
        $region28: #{tpu_custom_call.1} parent=19 // pred_fallthru
          _
      $region20: #{tpu_custom_call.1} parent=5 // pred_fallthru
        _
      %p228 = scmp.le.s32.totalorder 1, %s16
      %p229 = scmp.lt.s32.totalorder %s16, 3
      %p230 = pnand %p228, %p229
      %p231 = pneg %p230
      // Predicated region
      $region29: #{tpu_custom_call.1} parent=5 // pred_check
        _
      $region30: #{tpu_custom_call.1} parent=5 // pred_check_branch
        %233 = sbr.rel (%p230) target = $region32
      $region31: #{tpu_custom_call.1} parent=5 // pred_region
        %s234 = ssub.s32 %s16, 1
        %s235 = sand.u32 %s21, 1
        %s236 = scalar_lea.sflag [#allocation4], %s235
        %s237 = sand.u32 %s57, 1
        %s238 = smul.addr %s237, 4
        %s239 = scalar_lea.vmem [#allocation3], %s238
        // Predicated region
        $region33: #{tpu_custom_call.1} parent=31 // pred_check
          %p240 = pneg %p70
        $region34: #{tpu_custom_call.1} parent=31 // pred_check_branch
          %242 = sbr.rel (%p240) target = $region36
        $region35: #{tpu_custom_call.1} parent=31 // pred_region
          %243 = dma.done %s236, 64
        $region36: #{tpu_custom_call.1} parent=31 // pred_fallthru
          _
        // Predicated region
        $region37: #{tpu_custom_call.1} parent=31 // pred_check
          %p244 = pneg %p96
        $region38: #{tpu_custom_call.1} parent=31 // pred_check_branch
          %246 = sbr.rel (%p244) target = $region40
        $region39: #{tpu_custom_call.1} parent=31 // pred_region
          %247 = dma.done [#allocation7], 1024
        $region40: #{tpu_custom_call.1} parent=31 // pred_fallthru
          _
        %s248 = sand.u32 %s21, 1
        %s249 = scalar_lea.sflag [#allocation4], %s248
        %s250 = sand.u32 %s111, 1
        %s251 = smul.addr %s250, 4
        %s252 = scalar_lea.vmem [#allocation8], %s251
        // Predicated region
        $region41: #{tpu_custom_call.1} parent=31 // pred_check
          %p253 = pneg %p124
        $region42: #{tpu_custom_call.1} parent=31 // pred_check_branch
          %255 = sbr.rel (%p253) target = $region44
        $region43: #{tpu_custom_call.1} parent=31 // pred_region
          %256 = dma.done %s249, 64
        $region44: #{tpu_custom_call.1} parent=31 // pred_fallthru
          _
        %s257 = sand.u32 %s21, 1
        %s258 = scalar_lea.sflag [#allocation4], %s257
        %s259 = sand.u32 %s57, 1
        %s260 = smul.addr %s259, 4
        %s261 = scalar_lea.vmem [#allocation3], %s260
        %p262 = pneg %p70
        %p263 = pneg %p67
        %p264 = pneg %p96
        %p265 = pneg %p93
        %s266 = sand.u32 %s21, 1
        %s267 = scalar_lea.sflag [#allocation4], %s266
        %s268 = sand.u32 %s111, 1
        %s269 = smul.addr %s268, 4
        %s270 = scalar_lea.vmem [#allocation8], %s269
        %p271 = pneg %p124
        %p272 = pneg %p121
        %p273 = pneg %p156
        %p274 = pneg %p153
        %s275 = sand.u32 %s143, 1
        %s276 = scalar_lea.sflag [#allocation5], %s275
        %s277 = sand.u32 %s143, 1
        %s278 = smul.addr %s277, 8
        %s279 = scalar_lea.vmem [#allocation9], %s278
        %p281 = scmp.eq.s32.totalorder %s30, 0
        // Predicated region
        $region45: #{tpu_custom_call.1} parent=31 // pred_check
          %p282 = pneg %p281
        $region46: #{tpu_custom_call.1} parent=31 // pred_check_branch
          %284 = sbr.rel (%p282) target = $region48
        $region47: #{tpu_custom_call.1} parent=31 // pred_region
          %v285 = vld [vmem:[%s239] sm:$0xf]
          %v286 = vld [vmem:[#allocation6] sm:$0xf]
          %v287 = vld [vmem:[#allocation6 + $0x4] sm:$0xf]
          %v288 = vld [vmem:[#allocation6 + $0x8] sm:$0xf]
          %v289 = vld [vmem:[#allocation6 + $0xc] sm:$0xf]
          %v290 = vld [vmem:[#allocation6 + $0x10] sm:$0xf]
          %v291 = vld [vmem:[#allocation6 + $0x14] sm:$0xf]
          %v292 = vld [vmem:[#allocation6 + $0x18] sm:$0xf]
          %v293 = vld [vmem:[#allocation6 + $0x1c] sm:$0xf]
          %v294 = vld [vmem:[#allocation6 + $0x20] sm:$0xf]
          %v295 = vld [vmem:[#allocation6 + $0x24] sm:$0xf]
          %v296 = vld [vmem:[#allocation6 + $0x28] sm:$0xf]
          %v297 = vld [vmem:[#allocation6 + $0x2c] sm:$0xf]
          %v298 = vld [vmem:[#allocation6 + $0x30] sm:$0xf]
          %v299 = vld [vmem:[#allocation6 + $0x34] sm:$0xf]
          %v300 = vld [vmem:[#allocation6 + $0x38] sm:$0xf]
          %v301 = vld [vmem:[#allocation6 + $0x3c] sm:$0xf]
          %v318 = vunpack.c.l.b16 %v286
          %v319 = vunpack.c.l.b16 %v287
          %v320 = vunpack.c.l.b16 %v288
          %v321 = vunpack.c.l.b16 %v289
          %v322 = vunpack.c.l.b16 %v290
          %v323 = vunpack.c.l.b16 %v291
          %v324 = vunpack.c.l.b16 %v292
          %v325 = vunpack.c.l.b16 %v293
          %v326 = vunpack.c.l.b16 %v294
          %v327 = vunpack.c.l.b16 %v295
          %v328 = vunpack.c.l.b16 %v296
          %v329 = vunpack.c.l.b16 %v297
          %v330 = vunpack.c.l.b16 %v298
          %v331 = vunpack.c.l.b16 %v299
          %v332 = vunpack.c.l.b16 %v300
          %v333 = vunpack.c.l.b16 %v301
          %v334 = vpack.c.b16 %v319, %v318
          %v335 = vpack.c.b16 %v321, %v320
          %v336 = vpack.c.b16 %v323, %v322
          %v337 = vpack.c.b16 %v325, %v324
          %v338 = vpack.c.b16 %v327, %v326
          %v339 = vpack.c.b16 %v329, %v328
          %v340 = vpack.c.b16 %v331, %v330
          %v341 = vpack.c.b16 %v333, %v332
          %350 = vmatprep.subr.bf16.mxu0 0
          %351 = vmatpush1.bf16.msra.mxu0 %v334
          %352 = vmatprep.subr.bf16.mxu0 0
          %353 = vmatpush1.bf16.msra.mxu0 %v335
          %354 = vmatprep.subr.bf16.mxu0 0
          %355 = vmatpush1.bf16.msra.mxu0 %v336
          %356 = vmatprep.subr.bf16.mxu0 0
          %357 = vmatpush1.bf16.msra.mxu0 %v337
          %358 = vmatprep.subr.bf16.mxu0 0
          %359 = vmatpush1.bf16.msra.mxu0 %v338
          %360 = vmatprep.subr.bf16.mxu0 0
          %361 = vmatpush1.bf16.msra.mxu0 %v339
          %362 = vmatprep.subr.bf16.mxu0 0
          %363 = vmatpush1.bf16.msra.mxu0 %v340
          %364 = vmatprep.subr.bf16.mxu0 0
          %365 = vmatpush1.bf16.msra.mxu0 %v341
          %366 = vmatprep.subr.bf16.mxu0 0
          %367 = vmatpush1.bf16.msra.mxu0 0
          %368 = vmatprep.subr.bf16.mxu0 0
          %369 = vmatpush1.bf16.msra.mxu0 0
          %370 = vmatprep.subr.bf16.mxu0 0
          %371 = vmatpush1.bf16.msra.mxu0 0
          %372 = vmatprep.subr.bf16.mxu0 0
          %373 = vmatpush1.bf16.msra.mxu0 0
          %374 = vmatprep.subr.bf16.mxu0 0
          %375 = vmatpush1.bf16.msra.mxu0 0
          %376 = vmatprep.subr.bf16.mxu0 0
          %377 = vmatpush1.bf16.msra.mxu0 0
          %378 = vmatprep.subr.bf16.mxu0 0
          %379 = vmatpush1.bf16.msra.mxu0 0
          %380 = vmatprep.subr.bf16.mxu0 0
          %381 = vmatpush1.bf16.msra.mxu0 0
          %382 = vmatprep.mubr.bf16.mxu0 0
          %383 = vmatmul.mubr.bf16.gmra.mrb[0].mxu0 %v285
          %v384 = vpop.f32.mrb[0].mxu0
          %v385 = vadd.f32 0.0, %v384
          %v386 = vpop.f32.mrb[0].mxu0
          %v387 = vpop.f32.mrb[0].mxu0
          %v388 = vpop.f32.mrb[0].mxu0
          %389 = vdwg.mxu0
          %v390 = vpack.c.bf16 %v385, %v385
          %391 = vst [vmem:[#allocation2] sm:$0xf] %v390
        $region48: #{tpu_custom_call.1} parent=31 // pred_fallthru
          _
        %v392 = vld [vmem:[%s252] sm:$0xf]
        %v393 = vld [vmem:[#allocation2] sm:$0xf]
        %394 = vmatprep.subr.bf16.mxu0 0
        %395 = vmatpush1.bf16.xpose.msra.mxu0 %v392
        %396 = vmatprep.subr.bf16.mxu0 0
        %397 = vmatpush1.bf16.xpose.msra.mxu0 0
        %398 = vmatprep.subr.bf16.mxu0 0
        %399 = vmatpush1.bf16.xpose.msra.mxu0 0
        %400 = vmatprep.subr.bf16.mxu0 0
        %401 = vmatpush1.bf16.xpose.msra.mxu0 0
        %402 = vmatprep.subr.bf16.mxu0 0
        %403 = vmatpush1.bf16.xpose.msra.mxu0 0
        %404 = vmatprep.subr.bf16.mxu0 0
        %405 = vmatpush1.bf16.xpose.msra.mxu0 0
        %406 = vmatprep.subr.bf16.mxu0 0
        %407 = vmatpush1.bf16.xpose.msra.mxu0 0
        %408 = vmatprep.subr.bf16.mxu0 0
        %409 = vmatpush1.bf16.xpose.msra.mxu0 0
        %410 = vmatprep.subr.bf16.mxu0 0
        %411 = vmatpush1.bf16.xpose.msra.mxu0 0
        %412 = vmatprep.subr.bf16.mxu0 0
        %413 = vmatpush1.bf16.xpose.msra.mxu0 0
        %414 = vmatprep.subr.bf16.mxu0 0
        %415 = vmatpush1.bf16.xpose.msra.mxu0 0
        %416 = vmatprep.subr.bf16.mxu0 0
        %417 = vmatpush1.bf16.xpose.msra.mxu0 0
        %418 = vmatprep.subr.bf16.mxu0 0
        %419 = vmatpush1.bf16.xpose.msra.mxu0 0
        %420 = vmatprep.subr.bf16.mxu0 0
        %421 = vmatpush1.bf16.xpose.msra.mxu0 0
        %422 = vmatprep.subr.bf16.mxu0 0
        %423 = vmatpush1.bf16.xpose.msra.mxu0 0
        %424 = vmatprep.subr.bf16.mxu0 0
        %425 = vmatpush1.bf16.xpose.msra.mxu0 0
        %426 = vmatprep.mubr.bf16.mxu0 0
        %427 = vmatmul.mubr.bf16.gmra.mrb[0].mxu0 %v393
        %v428 = vpop.f32.mrb[0].mxu0
        %v429 = vadd.f32 0.0, %v428
        %v430 = vpop.f32.mrb[0].mxu0
        %v431 = vpop.f32.mrb[0].mxu0
        %v432 = vpop.f32.mrb[0].mxu0
        %433 = vdwg.mxu0
        %vm434 = vcmask 64512
        %435 = vst.msk [vmem:[%s279] sm:$0xff] %vm434, %v429
        %s436 = sand.u32 %s143, 1
        %s437 = scalar_lea.sflag [#allocation5], %s436
        %s438 = sand.u32 %s143, 1
        %s439 = smul.addr %s438, 8
        %s440 = scalar_lea.vmem [#allocation9], %s439
        // Predicated region
        $region49: #{tpu_custom_call.1} parent=31 // pred_check
          %p441 = pneg %p153
        $region50: #{tpu_custom_call.1} parent=31 // pred_check_branch
          %443 = sbr.rel (%p441) target = $region52
        $region51: #{tpu_custom_call.1} parent=31 // pred_region
          %s445 = ssub.s32 128, 128
          %446 = vsyncadd %s437, %s445
          %s447 = sadd.s32 %s30, %s29
          %s448 = sadd.s32 %s447, %s27
          %s449 = sadd.s32 %s448, %s28
          %s450 = smul.addr %s449, 128
          %s451 = scalar_lea.hbm %s3, %s450
          %s453 = sshll.u32 %s440, 4
          %s454 = int_to_ptr.vmem [resolvable:$true] %s453
          %456 = dma.vmem_to_hbm [thread:$0]  %s454, 128, %s451, %s437
        $region52: #{tpu_custom_call.1} parent=31 // pred_fallthru
          _
      $region32: #{tpu_custom_call.1} parent=5 // pred_fallthru
        _
      %p457 = scmp.le.s32.totalorder 2, %s16
      // Predicated region
      $region53: #{tpu_custom_call.1} parent=5 // pred_check
        %p458 = pneg %p457
      $region54: #{tpu_custom_call.1} parent=5 // pred_check_branch
        %460 = sbr.rel (%p458) target = $region56
      $region55: #{tpu_custom_call.1} parent=5 // pred_region
        %s461 = ssub.s32 %s16, 2
        // Predicated region
        $region57: #{tpu_custom_call.1} parent=55 // pred_check
          %p462 = pneg %p159
        $region58: #{tpu_custom_call.1} parent=55 // pred_check_branch
          %464 = sbr.rel (%p462) target = $region60
        $region59: #{tpu_custom_call.1} parent=55 // pred_region
          %s465 = sand.u32 %s144, 1
          %s466 = scalar_lea.sflag [#allocation5], %s465
          %s467 = sand.u32 %s144, 1
          %s468 = smul.addr %s467, 8
          %s469 = scalar_lea.vmem [#allocation9], %s468
          %470 = dma.done %s466, 128
        $region60: #{tpu_custom_call.1} parent=55 // pred_fallthru
          _
      $region56: #{tpu_custom_call.1} parent=5 // pred_fallthru
        _
    $region6: #{tpu_custom_call.1} parent=1 // loop_footer
      %s20 = sadd.s32 1, %s16
    $region7: #{tpu_custom_call.1} parent=1 // loop_footer_branch
      %15 = sbr.rel target = $region3
    $region8: #{tpu_custom_call.1} parent=1 // loop_exit
      _
    %471 = vsyncpa [#allocation4], 1
    %s472 = scalar_lea.sflag [#allocation4], 1
    %473 = vsyncpa %s472, 1
    %474 = vsyncpa [#allocation7], 1
    %475 = vsyncpa [#allocation5], 1
    %s476 = scalar_lea.sflag [#allocation5], 1
    %477 = vsyncpa %s476, 1

</llo_original>
